<compile_context>
chip_gen: v7x
topology: tpu7x:2x2x1
jax: 0.10.0
libtpu: 0.0.40
codegen_flags: <defaults>
</compile_context>

<pallas_src>
import jax
import jax.numpy as jnp
from jax.experimental import pallas as pl
from jax.experimental.pallas import tpu as pltpu


def _noisy_actor_kernel(
    x_ref,                    # (TB, S)   f32
    w1_ref, b1_ref,           # (S, F1)  bf16, (1, F1) f32
    w2_ref, b2_ref,           # (F1, F2) bf16 (noise pre-fused), (1, F2) f32
    w3_ref, b3_ref,           # (F2, A)  bf16 (noise pre-fused), (1, A)  f32
    out_ref,                  # (TB, A)   f32
):
    # fc1: Linear + ReLU (bf16 MXU inputs, f32 accumulate / epilogue)
    x = x_ref[...].astype(jnp.bfloat16)
    h1 = jnp.dot(x, w1_ref[...], preferred_element_type=jnp.float32) + b1_ref[...]
    h1 = jnp.maximum(h1, 0.0).astype(jnp.bfloat16)

    # fc2: NoisyLinear + ReLU — noise already fused into w2/b2, single matmul
    h2 = jnp.dot(h1, w2_ref[...], preferred_element_type=jnp.float32) + b2_ref[...]
    h2 = jnp.maximum(h2, 0.0).astype(jnp.bfloat16)

    # fc3: NoisyLinear + tanh — noise already fused into w3/b3
    h3 = jnp.dot(h2, w3_ref[...], preferred_element_type=jnp.float32) + b3_ref[...]
    out_ref[...] = jnp.tanh(h3)


def _pick_batch_tile(B):
    if B <= 1024:
        return B  # single tile, no padding, zero extra grid-step overhead
    # >1024: at least two tiles (v7x dual TensorCore), each <=1024 rows
    # (fits comfortably under the default scoped-VMEM limit on v5e/v6e/v7x),
    # rounded up to a sublane multiple of 8.
    nb = max(2, pl.cdiv(B, 1024))
    tb = pl.cdiv(B, nb)
    return ((tb + 7) // 8) * 8


def noisy_actor_forward(state, params, noise_key, *, tb=None):
    """state: (B, state_size) f32. Returns (B, action_size) f32 in [-1, 1].

    noise_key: jax PRNG key — pass a fresh key each forward to redraw epsilon
    (mirrors .normal_() on every PyTorch forward).
    """
    B, S = state.shape
    F1 = params["w1"].shape[1]
    F2 = params["w2"].shape[1]
    A = params["w3"].shape[1]

    # --- draw epsilon once per forward and fuse it into the noisy weights ---
    # TODO(synk): jax.random.normal is distributionally N(0,1) but not
    # bit-identical to torch's .normal_(); compare statistically.
    k2w, k2b, k3w, k3b = jax.random.split(noise_key, 4)
    ew2 = jax.random.normal(k2w, params["w2"].shape, jnp.float32)
    eb2 = jax.random.normal(k2b, params["b2"].shape, jnp.float32)
    ew3 = jax.random.normal(k3w, params["w3"].shape, jnp.float32)
    eb3 = jax.random.normal(k3b, params["b3"].shape, jnp.float32)

    w1 = params["w1"].astype(jnp.bfloat16)
    b1 = params["b1"]
    w2_eff = (params["w2"] + params["sw2"] * ew2).astype(jnp.bfloat16)
    b2_eff = params["b2"] + params["sb2"] * eb2
    w3_eff = (params["w3"] + params["sw3"] * ew3).astype(jnp.bfloat16)
    b3_eff = params["b3"] + params["sb3"] * eb3

    # --- batch tiling ---
    if tb is None:
        tb = _pick_batch_tile(B)
    nb = pl.cdiv(B, tb)
    Bp = nb * tb
    if Bp != B:
        state = jnp.pad(state, ((0, Bp - B), (0, 0)))

    flops = 2 * Bp * (S * F1 + F1 * F2 + F2 * A)
    bytes_accessed = (
        Bp * S * 4 + Bp * A * 4                      # x in, out
        + (S * F1 + F1 * F2 + F2 * A) * 2            # bf16 weights
        + (F1 + F2 + A) * 4                          # f32 bias rows
    )
    cost = pl.CostEstimate(
        flops=flops, transcendentals=Bp * A, bytes_accessed=bytes_accessed
    )

    out = pl.pallas_call(
        _noisy_actor_kernel,
        out_shape=jax.ShapeDtypeStruct((Bp, A), jnp.float32),
        grid_spec=pltpu.PrefetchScalarGridSpec(
            num_scalar_prefetch=0,
            grid=(nb,),
            in_specs=[
                pl.BlockSpec((tb, S), lambda i: (i, 0)),    # x: tiled over batch
                pl.BlockSpec((S, F1), lambda i: (0, 0)),    # w1 — VMEM-resident
                pl.BlockSpec((1, F1), lambda i: (0, 0)),    # b1
                pl.BlockSpec((F1, F2), lambda i: (0, 0)),   # w2 (noise fused)
                pl.BlockSpec((1, F2), lambda i: (0, 0)),    # b2 (noise fused)
                pl.BlockSpec((F2, A), lambda i: (0, 0)),    # w3 (noise fused)
                pl.BlockSpec((1, A), lambda i: (0, 0)),     # b3 (noise fused)
            ],
            out_specs=pl.BlockSpec((tb, A), lambda i: (i, 0)),
        ),
        compiler_params=pltpu.CompilerParams(
            dimension_semantics=("parallel",),
        ),
        cost_estimate=cost,
    )(
        state,
        w1, b1,
        w2_eff, b2_eff,
        w3_eff, b3_eff,
    )
    return out[:B]


def init_params(key, state_size, action_size, fc1_units=400, fc2_units=300,
                sigma=0.07):
    """Init mirroring NoisyActor.__init__ / reset_parameters.

    hidden_init uses weight.size()[0] == out_features as 'fan_in' (reproduced
    faithfully). Weights are stored transposed (in, out) in f32; biases keep
    the nn.Linear default init as (1, out) rows; sigma parameters are the
    per-element tensors of the NoisyLinear module (learnable in PyTorch),
    initialized to the scalar sigma.
    """
    ks = jax.random.split(key, 6)
    lim1 = 1.0 / (fc1_units ** 0.5)     # hidden_init(fc1)
    lim2 = 1.0 / (fc2_units ** 0.5)     # hidden_init(fc2)
    lim3 = 0.003
    blim1 = 1.0 / (state_size ** 0.5)   # default nn.Linear bias init
    blim2 = 1.0 / (fc1_units ** 0.5)
    blim3 = 1.0 / (fc2_units ** 0.5)

    def u(k, shape, lo, hi):
        return jax.random.uniform(k, shape, jnp.float32, lo, hi)

    return dict(
        w1=u(ks[0], (state_size, fc1_units), -lim1, lim1),
        b1=u(ks[1], (1, fc1_units), -blim1, blim1),
        w2=u(ks[2], (fc1_units, fc2_units), -lim2, lim2),
        b2=u(ks[3], (1, fc2_units), -blim2, blim2),
        sw2=jnp.full((fc1_units, fc2_units), sigma, jnp.float32),
        sb2=jnp.full((1, fc2_units), sigma, jnp.float32),
        w3=u(ks[4], (fc2_units, action_size), -lim3, lim3),
        b3=u(ks[5], (1, action_size), -blim3, blim3),
        sw3=jnp.full((fc2_units, action_size), sigma, jnp.float32),
        sb3=jnp.full((1, action_size), sigma, jnp.float32),
    )


if __name__ == "__main__":
    key = jax.random.PRNGKey(0)
    k_param, k_state, k_noise = jax.random.split(key, 3)

    batch = 8
    state_size = 33       # e.g. Reacher continuous-control state dim
    action_size = 4

    params = init_params(k_param, state_size, action_size)
    state = jax.random.normal(k_state, (batch, state_size), jnp.float32)

    actions = noisy_actor_forward(state, params, k_noise)
    jax.block_until_ready(actions)

    assert actions.shape == (batch, action_size)
    assert bool(jnp.all(jnp.abs(actions) <= 1.0))
    assert bool(jnp.all(jnp.isfinite(actions)))
    print("KERNEL_OK")
</pallas_src>

<mosaic_0001>
module attributes {stable_mosaic.version = 11 : i64} {
  func.func @_noisy_actor_kernel(%arg0: i32, %arg1: memref<8x33xf32, #tpu.memory_space<vmem>>, %arg2: memref<33x400xbf16, #tpu.memory_space<vmem>>, %arg3: memref<1x400xf32, #tpu.memory_space<vmem>>, %arg4: memref<400x300xbf16, #tpu.memory_space<vmem>>, %arg5: memref<1x300xf32, #tpu.memory_space<vmem>>, %arg6: memref<300x4xbf16, #tpu.memory_space<vmem>>, %arg7: memref<1x4xf32, #tpu.memory_space<vmem>>, %arg8: memref<8x4xf32, #tpu.memory_space<vmem>>) attributes {dimension_semantics = [#tpu.dimension_semantics<parallel>], iteration_bounds = array<i64: 1>, scalar_prefetch = 0 : i64, scratch_operands = 0 : i64, tpu.core_type = #tpu.core_type<tc>, window_params = [{transform_indices = @transform_0, window_bounds = array<i64: 8, 33>}, {pipeline_mode = #tpu.pipeline_mode<synchronous>, transform_indices = @transform_1, window_bounds = array<i64: 33, 400>}, {pipeline_mode = #tpu.pipeline_mode<synchronous>, transform_indices = @transform_2, window_bounds = array<i64: 1, 400>}, {pipeline_mode = #tpu.pipeline_mode<synchronous>, transform_indices = @transform_3, window_bounds = array<i64: 400, 300>}, {pipeline_mode = #tpu.pipeline_mode<synchronous>, transform_indices = @transform_4, window_bounds = array<i64: 1, 300>}, {pipeline_mode = #tpu.pipeline_mode<synchronous>, transform_indices = @transform_5, window_bounds = array<i64: 300, 4>}, {pipeline_mode = #tpu.pipeline_mode<synchronous>, transform_indices = @transform_6, window_bounds = array<i64: 1, 4>}, {transform_indices = @transform_7, window_bounds = array<i64: 8, 4>}]} {
    %c0 = arith.constant 0 : index
    %c0_0 = arith.constant 0 : index
    %0 = vector.load %arg1[%c0, %c0_0] : memref<8x33xf32, #tpu.memory_space<vmem>>, vector<8x33xf32>
    %1 = arith.truncf %0 : vector<8x33xf32> to vector<8x33xbf16>
    %c0_1 = arith.constant 0 : index
    %c0_2 = arith.constant 0 : index
    %2 = vector.load %arg2[%c0_1, %c0_2] : memref<33x400xbf16, #tpu.memory_space<vmem>>, vector<33x400xbf16>
    %cst = arith.constant dense<0.000000e+00> : vector<8x400xf32>
    %3 = tpu.matmul %1, %2, %cst {dimension_numbers = #tpu.dot_dimension_numbers<[1], [0], [0], [1], [0, 0, 1, 1], [], []>} : vector<8x33xbf16>, vector<33x400xbf16>, vector<8x400xf32> -> vector<8x400xf32>
    %c0_3 = arith.constant 0 : index
    %c0_4 = arith.constant 0 : index
    %4 = vector.load %arg3[%c0_3, %c0_4] : memref<1x400xf32, #tpu.memory_space<vmem>>, vector<1x400xf32>
    %5 = vector.broadcast %4 : vector<1x400xf32> to vector<8x400xf32>
    %6 = arith.addf %3, %5 : vector<8x400xf32>
    %cst_5 = arith.constant 0.000000e+00 : f32
    %7 = vector.broadcast %cst_5 : f32 to vector<8x400xf32>
    %8 = arith.maximumf %6, %7 : vector<8x400xf32>
    %9 = arith.truncf %8 : vector<8x400xf32> to vector<8x400xbf16>
    %c0_6 = arith.constant 0 : index
    %c0_7 = arith.constant 0 : index
    %10 = vector.load %arg4[%c0_6, %c0_7] : memref<400x300xbf16, #tpu.memory_space<vmem>>, vector<400x300xbf16>
    %cst_8 = arith.constant dense<0.000000e+00> : vector<8x300xf32>
    %11 = tpu.matmul %9, %10, %cst_8 {dimension_numbers = #tpu.dot_dimension_numbers<[1], [0], [0], [1], [0, 0, 1, 1], [], []>} : vector<8x400xbf16>, vector<400x300xbf16>, vector<8x300xf32> -> vector<8x300xf32>
    %c0_9 = arith.constant 0 : index
    %c0_10 = arith.constant 0 : index
    %12 = vector.load %arg5[%c0_9, %c0_10] : memref<1x300xf32, #tpu.memory_space<vmem>>, vector<1x300xf32>
    %13 = vector.broadcast %12 : vector<1x300xf32> to vector<8x300xf32>
    %14 = arith.addf %11, %13 : vector<8x300xf32>
    %cst_11 = arith.constant 0.000000e+00 : f32
    %15 = vector.broadcast %cst_11 : f32 to vector<8x300xf32>
    %16 = arith.maximumf %14, %15 : vector<8x300xf32>
    %17 = arith.truncf %16 : vector<8x300xf32> to vector<8x300xbf16>
    %c0_12 = arith.constant 0 : index
    %c0_13 = arith.constant 0 : index
    %18 = vector.load %arg6[%c0_12, %c0_13] : memref<300x4xbf16, #tpu.memory_space<vmem>>, vector<300x4xbf16>
    %cst_14 = arith.constant dense<0.000000e+00> : vector<8x4xf32>
    %19 = tpu.matmul %17, %18, %cst_14 {dimension_numbers = #tpu.dot_dimension_numbers<[1], [0], [0], [1], [0, 0, 1, 1], [], []>} : vector<8x300xbf16>, vector<300x4xbf16>, vector<8x4xf32> -> vector<8x4xf32>
    %c0_15 = arith.constant 0 : index
    %c0_16 = arith.constant 0 : index
    %20 = vector.load %arg7[%c0_15, %c0_16] : memref<1x4xf32, #tpu.memory_space<vmem>>, vector<1x4xf32>
    %21 = vector.broadcast %20 : vector<1x4xf32> to vector<8x4xf32>
    %22 = arith.addf %19, %21 : vector<8x4xf32>
    %23 = math.tanh %22 : vector<8x4xf32>
    %c0_17 = arith.constant 0 : index
    %c0_18 = arith.constant 0 : index
    %24 = vector.load %arg8[%c0_17, %c0_18] : memref<8x4xf32, #tpu.memory_space<vmem>>, vector<8x4xf32>
    tpu.vector_store %arg8[%c0_17, %c0_18], %23 {strides = array<i32>} : memref<8x4xf32, #tpu.memory_space<vmem>>, vector<8x4xf32>,
    return
  }
  func.func @transform_0(%arg0: i32) -> (i32, i32) {
    %c0_i32 = arith.constant 0 : i32
    %c0_i32_0 = arith.constant 0 : i32
    return %arg0, %c0_i32 : i32, i32
  }
  func.func @transform_1(%arg0: i32) -> (i32, i32) {
    %c0_i32 = arith.constant 0 : i32
    %c0_i32_0 = arith.constant 0 : i32
    %c0_i32_1 = arith.constant 0 : i32
    return %c0_i32, %c0_i32_0 : i32, i32
  }
  func.func @transform_2(%arg0: i32) -> (i32, i32) {
    %c0_i32 = arith.constant 0 : i32
    %c0_i32_0 = arith.constant 0 : i32
    %c0_i32_1 = arith.constant 0 : i32
    return %c0_i32, %c0_i32_0 : i32, i32
  }
  func.func @transform_3(%arg0: i32) -> (i32, i32) {
    %c0_i32 = arith.constant 0 : i32
    %c0_i32_0 = arith.constant 0 : i32
    %c0_i32_1 = arith.constant 0 : i32
    return %c0_i32, %c0_i32_0 : i32, i32
  }
  func.func @transform_4(%arg0: i32) -> (i32, i32) {
    %c0_i32 = arith.constant 0 : i32
    %c0_i32_0 = arith.constant 0 : i32
    %c0_i32_1 = arith.constant 0 : i32
    return %c0_i32, %c0_i32_0 : i32, i32
  }
  func.func @transform_5(%arg0: i32) -> (i32, i32) {
    %c0_i32 = arith.constant 0 : i32
    %c0_i32_0 = arith.constant 0 : i32
    %c0_i32_1 = arith.constant 0 : i32
    return %c0_i32, %c0_i32_0 : i32, i32
  }
  func.func @transform_6(%arg0: i32) -> (i32, i32) {
    %c0_i32 = arith.constant 0 : i32
    %c0_i32_0 = arith.constant 0 : i32
    %c0_i32_1 = arith.constant 0 : i32
    return %c0_i32, %c0_i32_0 : i32, i32
  }
  func.func @transform_7(%arg0: i32) -> (i32, i32) {
    %c0_i32 = arith.constant 0 : i32
    %c0_i32_0 = arith.constant 0 : i32
    return %arg0, %c0_i32 : i32, i32
  }
}

</mosaic_0001>

<llo_original>
// kernel: tpu_custom_call.1
$region0: #{tpu_custom_call.1}
  #allocation0 [shape = 'u32[]', space=smem, size = 0x4, offset = 0x4, fixed_abs, tag = 'smem constant byte address 0x4 - core index']
  #allocation1 [shape = 'u32[144,128]{1,0:T(1,128)}', space=vmem, size = 0x12000, scoped, tag = 'internal scratch']
  %s0 = inlined_call_operand.vmem [shape: f32[8,33], index: 0, kind: input, shape index: {}]
  %s1 = inlined_call_operand.vmem [shape: bf16[33,400], index: 1, kind: input, shape index: {}]
  %s2 = inlined_call_operand.vmem [shape: f32[1,400], index: 2, kind: input, shape index: {}]
  %s3 = inlined_call_operand.hbm [shape: bf16[400,300], index: 3, kind: input, shape index: {}]
  %s4 = inlined_call_operand.vmem [shape: f32[1,300], index: 4, kind: input, shape index: {}]
  %s5 = inlined_call_operand.vmem [shape: bf16[300,4], index: 5, kind: input, shape index: {}]
  %s6 = inlined_call_operand.vmem [shape: f32[1,4], index: 6, kind: input, shape index: {}]
  %s7 = inlined_call_operand.vmem [shape: f32[8,4], index: 7, kind: output, shape index: {}]
  %s8 = sld [smem:[#allocation0]]
  $region42: #{tpu_custom_call.1} parent=0
    _
  %s10 = ssub.s32 1, %s8
  %s11 = scalar_select 0, %s10, %s8
  $region1: #{tpu_custom_call.1} parent=0
    #allocation2 [shape = 'u8[307200]{0}', space=vmem, size = 0x4b000, scoped, tag = 'input window, operand 3, single buffered']
    #allocation3 [shape = 's32[1]{0}', space=sflag, size = 0x4, scoped, tag = 'scoped memory for tpu_custom_call.1']
    %12 = vsyncpa [#allocation3], 0
    // Predicated region
    $region2: #{tpu_custom_call.1} parent=1 // pred_check
      _
    $region3: #{tpu_custom_call.1} parent=1 // pred_check_branch
      %14 = sbr.rel (0) target = $region5
    $region4: #{tpu_custom_call.1} parent=1 // pred_region
      _
    $region5: #{tpu_custom_call.1} parent=1 // pred_fallthru
      _
    // Predicated region
    $region6: #{tpu_custom_call.1} parent=1 // pred_check
      _
    $region7: #{tpu_custom_call.1} parent=1 // pred_check_branch
      %16 = sbr.rel (0) target = $region9
    $region8: #{tpu_custom_call.1} parent=1 // pred_region
      _
    $region9: #{tpu_custom_call.1} parent=1 // pred_fallthru
      _
    // Predicated region
    $region10: #{tpu_custom_call.1} parent=1 // pred_check
      _
    $region11: #{tpu_custom_call.1} parent=1 // pred_check_branch
      %18 = sbr.rel (0) target = $region13
    $region12: #{tpu_custom_call.1} parent=1 // pred_region
      _
    $region13: #{tpu_custom_call.1} parent=1 // pred_fallthru
      _
    // Predicated region
    $region14: #{tpu_custom_call.1} parent=1 // pred_check
      _
    $region15: #{tpu_custom_call.1} parent=1 // pred_check_branch
      %20 = sbr.rel (0) target = $region17
    $region16: #{tpu_custom_call.1} parent=1 // pred_region
      %s22 = ssub.s32 9600, 9600
      %23 = vsyncadd [#allocation3], %s22
      %s24 = sshll.u32 [#allocation2], 4
      %s25 = int_to_ptr.vmem [resolvable:$true] %s24
      %30 = dma.hbm_to_vmem [thread:$0]  %s3, 9600, %s25, [#allocation3], 192, 192, 12
    $region17: #{tpu_custom_call.1} parent=1 // pred_fallthru
      _
    // Predicated region
    $region18: #{tpu_custom_call.1} parent=1 // pred_check
      _
    $region19: #{tpu_custom_call.1} parent=1 // pred_check_branch
      %32 = sbr.rel (0) target = $region21
    $region20: #{tpu_custom_call.1} parent=1 // pred_region
      _
    $region21: #{tpu_custom_call.1} parent=1 // pred_fallthru
      _
    // Predicated region
    $region22: #{tpu_custom_call.1} parent=1 // pred_check
      _
    $region23: #{tpu_custom_call.1} parent=1 // pred_check_branch
      %34 = sbr.rel (0) target = $region25
    $region24: #{tpu_custom_call.1} parent=1 // pred_region
      _
    $region25: #{tpu_custom_call.1} parent=1 // pred_fallthru
      _
    // Predicated region
    $region26: #{tpu_custom_call.1} parent=1 // pred_check
      _
    $region27: #{tpu_custom_call.1} parent=1 // pred_check_branch
      %36 = sbr.rel (0) target = $region29
    $region28: #{tpu_custom_call.1} parent=1 // pred_region
      _
    $region29: #{tpu_custom_call.1} parent=1 // pred_fallthru
      _
    // Predicated region
    $region30: #{tpu_custom_call.1} parent=1 // pred_check
      _
    $region31: #{tpu_custom_call.1} parent=1 // pred_check_branch
      %38 = sbr.rel (0) target = $region33
    $region32: #{tpu_custom_call.1} parent=1 // pred_region
      %39 = dma.done [#allocation3], 9600
    $region33: #{tpu_custom_call.1} parent=1 // pred_fallthru
      _
    %v41 = vld [vmem:[%s0] sm:$0xff]
    %v42 = vpack.c.bf16 %v41, %v41
    %v43 = vld [vmem:[%s1] sm:$0xff]
    %v44 = vld [vmem:[%s1 + $0x8] sm:$0xff]
    %v45 = vld [vmem:[%s1 + $0x10] sm:$0xff]
    %v46 = vld [vmem:[%s1 + $0x18] sm:$0xff]
    %v47 = vld [vmem:[%s1 + $0x20] sm:$0xff]
    %v48 = vld [vmem:[%s1 + $0x28] sm:$0xff]
    %v49 = vld [vmem:[%s1 + $0x30] sm:$0xff]
    %v50 = vld [vmem:[%s1 + $0x38] sm:$0xff]
    %v51 = vld [vmem:[%s1 + $0x40] sm:$0x11]
    %v52 = vld [vmem:[%s1 + $0x48] sm:$0x11]
    %v53 = vld [vmem:[%s2] sm:$0xf]
    %v55 = vlaneseq
    %v56 = vshrl.u32 %v55, 7
    %v57 = vsub.s32 0, %v56
    %v58 = vrot.slane %v53, %v57
    %v59 = vlaneseq
    %v60 = vshrl.u32 %v59, 7
    %v61 = vsub.s32 1, %v60
    %v62 = vrot.slane %v53, %v61
    %v63 = vlaneseq
    %v64 = vshrl.u32 %v63, 7
    %v65 = vsub.s32 2, %v64
    %v66 = vrot.slane %v53, %v65
    %v67 = vlaneseq
    %v68 = vshrl.u32 %v67, 7
    %v69 = vsub.s32 3, %v68
    %v70 = vrot.slane %v53, %v69
    %v85 = vunpack.c.l.b16 %v43
    %v86 = vunpack.c.h.b16 %v43
    %v87 = vunpack.c.l.b16 %v44
    %v88 = vunpack.c.h.b16 %v44
    %v89 = vunpack.c.l.b16 %v45
    %v90 = vunpack.c.h.b16 %v45
    %v91 = vunpack.c.l.b16 %v46
    %v92 = vunpack.c.h.b16 %v46
    %v93 = vunpack.c.l.b16 %v47
    %v94 = vunpack.c.h.b16 %v47
    %v95 = vunpack.c.l.b16 %v48
    %v96 = vunpack.c.h.b16 %v48
    %v97 = vunpack.c.l.b16 %v49
    %v98 = vunpack.c.h.b16 %v49
    %v99 = vunpack.c.l.b16 %v50
    %v100 = vunpack.c.h.b16 %v50
    %v101 = vunpack.c.l.b16 %v51
    %v102 = vunpack.c.h.b16 %v51
    %v103 = vunpack.c.l.b16 %v52
    %v104 = vunpack.c.h.b16 %v52
    %v105 = vpack.c.b16 %v89, %v85
    %v106 = vpack.c.b16 %v90, %v86
    %v107 = vpack.c.b16 %v91, %v87
    %v108 = vpack.c.b16 %v92, %v88
    %v109 = vpack.c.b16 %v97, %v93
    %v110 = vpack.c.b16 %v98, %v94
    %v111 = vpack.c.b16 %v99, %v95
    %v112 = vpack.c.b16 %v100, %v96
    %v113 = vpack.c.b16 %v101, %v101
    %v114 = vpack.c.b16 %v102, %v102
    %v115 = vpack.c.b16 %v103, %v103
    %v116 = vpack.c.b16 %v104, %v104
    %vm125 = vcmask 269312
    %v127 = vsel %vm125, %v42, 0
    %vm129 = vcmask 1040384
    %v130 = vsel 0, 4294967295, 65535
    %v131 = vsel %vm129, %v130, 0
    %v133 = vand.u32 %v113, %v131
    %v136 = vand.u32 %v114, %v131
    %v139 = vand.u32 %v115, %v131
    %v142 = vand.u32 %v116, %v131
    %144 = vmatprep.subr.bf16.mxu0 %v106
    %145 = vmatpush1.bf16.msra.mxu0 %v105
    %146 = vmatprep.subr.bf16.mxu0 %v110
    %147 = vmatpush1.bf16.msra.mxu0 %v109
    %148 = vmatprep.subr.bf16.mxu0 %v136
    %149 = vmatpush1.bf16.msra.mxu0 %v133
    %150 = vmatprep.subr.bf16.mxu0 0
    %151 = vmatpush1.bf16.msra.mxu0 0
    %152 = vmatprep.subr.bf16.mxu0 0
    %153 = vmatpush1.bf16.msra.mxu0 0
    %154 = vmatprep.subr.bf16.mxu0 0
    %155 = vmatpush1.bf16.msra.mxu0 0
    %156 = vmatprep.subr.bf16.mxu0 0
    %157 = vmatpush1.bf16.msra.mxu0 0
    %158 = vmatprep.subr.bf16.mxu0 0
    %159 = vmatpush1.bf16.msra.mxu0 0
    %160 = vmatprep.subr.bf16.mxu0 0
    %161 = vmatpush1.bf16.msra.mxu0 0
    %162 = vmatprep.subr.bf16.mxu0 0
    %163 = vmatpush1.bf16.msra.mxu0 0
    %164 = vmatprep.subr.bf16.mxu0 0
    %165 = vmatpush1.bf16.msra.mxu0 0
    %166 = vmatprep.subr.bf16.mxu0 0
    %167 = vmatpush1.bf16.msra.mxu0 0
    %168 = vmatprep.subr.bf16.mxu0 0
    %169 = vmatpush1.bf16.msra.mxu0 0
    %170 = vmatprep.subr.bf16.mxu0 0
    %171 = vmatpush1.bf16.msra.mxu0 0
    %172 = vmatprep.subr.bf16.mxu0 0
    %173 = vmatpush1.bf16.msra.mxu0 0
    %174 = vmatprep.subr.bf16.mxu0 0
    %175 = vmatpush1.bf16.msra.mxu0 0
    %176 = vmatprep.mubr.bf16.mxu0 0
    %177 = vmatmul.mubr.bf16.gmra.mrb[0].mxu0 %v127
    %v178 = vpop.f32.mrb[0].mxu0
    %v179 = vadd.f32 %v58, %v178
    %v180 = vpop.f32.mrb[0].mxu0
    %v181 = vadd.f32 %v62, %v180
    %v182 = vpop.f32.mrb[0].mxu0
    %v183 = vpop.f32.mrb[0].mxu0
    %184 = vdwg.mxu0
    %185 = vmatprep.subr.bf16.mxu0 %v108
    %186 = vmatpush1.bf16.msra.mxu0 %v107
    %187 = vmatprep.subr.bf16.mxu0 %v112
    %188 = vmatpush1.bf16.msra.mxu0 %v111
    %189 = vmatprep.subr.bf16.mxu0 %v142
    %190 = vmatpush1.bf16.msra.mxu0 %v139
    %191 = vmatprep.subr.bf16.mxu0 0
    %192 = vmatpush1.bf16.msra.mxu0 0
    %193 = vmatprep.subr.bf16.mxu0 0
    %194 = vmatpush1.bf16.msra.mxu0 0
    %195 = vmatprep.subr.bf16.mxu0 0
    %196 = vmatpush1.bf16.msra.mxu0 0
    %197 = vmatprep.subr.bf16.mxu0 0
    %198 = vmatpush1.bf16.msra.mxu0 0
    %199 = vmatprep.subr.bf16.mxu0 0
    %200 = vmatpush1.bf16.msra.mxu0 0
    %201 = vmatprep.subr.bf16.mxu0 0
    %202 = vmatpush1.bf16.msra.mxu0 0
    %203 = vmatprep.subr.bf16.mxu0 0
    %204 = vmatpush1.bf16.msra.mxu0 0
    %205 = vmatprep.subr.bf16.mxu0 0
    %206 = vmatpush1.bf16.msra.mxu0 0
    %207 = vmatprep.subr.bf16.mxu0 0
    %208 = vmatpush1.bf16.msra.mxu0 0
    %209 = vmatprep.subr.bf16.mxu0 0
    %210 = vmatpush1.bf16.msra.mxu0 0
    %211 = vmatprep.subr.bf16.mxu0 0
    %212 = vmatpush1.bf16.msra.mxu0 0
    %213 = vmatprep.subr.bf16.mxu0 0
    %214 = vmatpush1.bf16.msra.mxu0 0
    %215 = vmatprep.subr.bf16.mxu0 0
    %216 = vmatpush1.bf16.msra.mxu0 0
    %217 = vmatprep.mubr.bf16.mxu0 0
    %218 = vmatmul.mubr.bf16.gmra.mrb[0].mxu0 %v127
    %v219 = vpop.f32.mrb[0].mxu0
    %v220 = vadd.f32 %v66, %v219
    %v221 = vpop.f32.mrb[0].mxu0
    %v222 = vadd.f32 %v70, %v221
    %v223 = vpop.f32.mrb[0].mxu0
    %v224 = vpop.f32.mrb[0].mxu0
    %225 = vdwg.mxu0
    %v226 = vmax.f32 %v179, 0.0
    %v227 = vmax.f32 %v181, 0.0
    %v228 = vmax.f32 %v220, 0.0
    %v229 = vmax.f32 %v222, 0.0
    %v230 = vpack.c.bf16 %v226, %v226
    %v231 = vpack.c.bf16 %v227, %v227
    %v232 = vpack.c.bf16 %v228, %v228
    %v233 = vpack.c.bf16 %v229, %v229
    %v234 = vld [vmem:[#allocation2] sm:$0xff]
    %v235 = vld [vmem:[#allocation2 + $0x8] sm:$0xf]
    %v236 = vld [vmem:[#allocation2 + $0xc] sm:$0xff]
    %v237 = vld [vmem:[#allocation2 + $0x14] sm:$0xf]
    %v238 = vld [vmem:[#allocation2 + $0x18] sm:$0xff]
    %v239 = vld [vmem:[#allocation2 + $0x20] sm:$0xf]
    %v240 = vld [vmem:[#allocation2 + $0x24] sm:$0xff]
    %v241 = vld [vmem:[#allocation2 + $0x2c] sm:$0xf]
    %v242 = vld [vmem:[#allocation2 + $0x30] sm:$0xff]
    %v243 = vld [vmem:[#allocation2 + $0x38] sm:$0xf]
    %v244 = vld [vmem:[#allocation2 + $0x3c] sm:$0xff]
    %v245 = vld [vmem:[#allocation2 + $0x44] sm:$0xf]
    %v246 = vld [vmem:[#allocation2 + $0x48] sm:$0xff]
    %v247 = vld [vmem:[#allocation2 + $0x50] sm:$0xf]
    %v248 = vld [vmem:[#allocation2 + $0x54] sm:$0xff]
    %v249 = vld [vmem:[#allocation2 + $0x5c] sm:$0xf]
    %v250 = vld [vmem:[#allocation2 + $0x60] sm:$0xff]
    %v251 = vld [vmem:[#allocation2 + $0x68] sm:$0xf]
    %v252 = vld [vmem:[#allocation2 + $0x6c] sm:$0xff]
    %v253 = vld [vmem:[#allocation2 + $0x74] sm:$0xf]
    %v254 = vld [vmem:[#allocation2 + $0x78] sm:$0xff]
    %v255 = vld [vmem:[#allocation2 + $0x80] sm:$0xf]
    %v256 = vld [vmem:[#allocation2 + $0x84] sm:$0xff]
    %v257 = vld [vmem:[#allocation2 + $0x8c] sm:$0xf]
    %v258 = vld [vmem:[#allocation2 + $0x90] sm:$0xff]
    %v259 = vld [vmem:[#allocation2 + $0x98] sm:$0xf]
    %v260 = vld [vmem:[#allocation2 + $0x9c] sm:$0xff]
    %v261 = vld [vmem:[#allocation2 + $0xa4] sm:$0xf]
    %v262 = vld [vmem:[#allocation2 + $0xa8] sm:$0xff]
    %v263 = vld [vmem:[#allocation2 + $0xb0] sm:$0xf]
    %v264 = vld [vmem:[#allocation2 + $0xb4] sm:$0xff]
    %v265 = vld [vmem:[#allocation2 + $0xbc] sm:$0xf]
    %v266 = vld [vmem:[#allocation2 + $0xc0] sm:$0xff]
    %v267 = vld [vmem:[#allocation2 + $0xc8] sm:$0xf]
    %v268 = vld [vmem:[#allocation2 + $0xcc] sm:$0xff]
    %v269 = vld [vmem:[#allocation2 + $0xd4] sm:$0xf]
    %v270 = vld [vmem:[#allocation2 + $0xd8] sm:$0xff]
    %v271 = vld [vmem:[#allocation2 + $0xe0] sm:$0xf]
    %v272 = vld [vmem:[#allocation2 + $0xe4] sm:$0xff]
    %v273 = vld [vmem:[#allocation2 + $0xec] sm:$0xf]
    %v274 = vld [vmem:[#allocation2 + $0xf0] sm:$0xff]
    %v275 = vld [vmem:[#allocation2 + $0xf8] sm:$0xf]
    %v276 = vld [vmem:[#allocation2 + $0xfc] sm:$0xff]
    %v277 = vld [vmem:[#allocation2 + $0x104] sm:$0xf]
    %v278 = vld [vmem:[#allocation2 + $0x108] sm:$0xff]
    %v279 = vld [vmem:[#allocation2 + $0x110] sm:$0xf]
    %v280 = vld [vmem:[#allocation2 + $0x114] sm:$0xff]
    %v281 = vld [vmem:[#allocation2 + $0x11c] sm:$0xf]
    %v282 = vld [vmem:[#allocation2 + $0x120] sm:$0xff]
    %v283 = vld [vmem:[#allocation2 + $0x128] sm:$0xf]
    %v284 = vld [vmem:[#allocation2 + $0x12c] sm:$0xff]
    %v285 = vld [vmem:[#allocation2 + $0x134] sm:$0xf]
    %v286 = vld [vmem:[#allocation2 + $0x138] sm:$0xff]
    %v287 = vld [vmem:[#allocation2 + $0x140] sm:$0xf]
    %v288 = vld [vmem:[#allocation2 + $0x144] sm:$0xff]
    %v289 = vld [vmem:[#allocation2 + $0x14c] sm:$0xf]
    %v290 = vld [vmem:[#allocation2 + $0x150] sm:$0xff]
    %v291 = vld [vmem:[#allocation2 + $0x158] sm:$0xf]
    %v292 = vld [vmem:[#allocation2 + $0x15c] sm:$0xff]
    %v293 = vld [vmem:[#allocation2 + $0x164] sm:$0xf]
    %v294 = vld [vmem:[#allocation2 + $0x168] sm:$0xff]
    %v295 = vld [vmem:[#allocation2 + $0x170] sm:$0xf]
    %v296 = vld [vmem:[#allocation2 + $0x174] sm:$0xff]
    %v297 = vld [vmem:[#allocation2 + $0x17c] sm:$0xf]
    %v298 = vld [vmem:[#allocation2 + $0x180] sm:$0xff]
    %v299 = vld [vmem:[#allocation2 + $0x188] sm:$0xf]
    %v300 = vld [vmem:[#allocation2 + $0x18c] sm:$0xff]
    %v301 = vld [vmem:[#allocation2 + $0x194] sm:$0xf]
    %v302 = vld [vmem:[#allocation2 + $0x198] sm:$0xff]
    %v303 = vld [vmem:[#allocation2 + $0x1a0] sm:$0xf]
    %v304 = vld [vmem:[#allocation2 + $0x1a4] sm:$0xff]
    %v305 = vld [vmem:[#allocation2 + $0x1ac] sm:$0xf]
    %v306 = vld [vmem:[#allocation2 + $0x1b0] sm:$0xff]
    %v307 = vld [vmem:[#allocation2 + $0x1b8] sm:$0xf]
    %v308 = vld [vmem:[#allocation2 + $0x1bc] sm:$0xff]
    %v309 = vld [vmem:[#allocation2 + $0x1c4] sm:$0xf]
    %v310 = vld [vmem:[#allocation2 + $0x1c8] sm:$0xff]
    %v311 = vld [vmem:[#allocation2 + $0x1d0] sm:$0xf]
    %v312 = vld [vmem:[#allocation2 + $0x1d4] sm:$0xff]
    %v313 = vld [vmem:[#allocation2 + $0x1dc] sm:$0xf]
    %v314 = vld [vmem:[#allocation2 + $0x1e0] sm:$0xff]
    %v315 = vld [vmem:[#allocation2 + $0x1e8] sm:$0xf]
    %v316 = vld [vmem:[#allocation2 + $0x1ec] sm:$0xff]
    %v317 = vld [vmem:[#allocation2 + $0x1f4] sm:$0xf]
    %v318 = vld [vmem:[#allocation2 + $0x1f8] sm:$0xff]
    %v319 = vld [vmem:[#allocation2 + $0x200] sm:$0xf]
    %v320 = vld [vmem:[#allocation2 + $0x204] sm:$0xff]
    %v321 = vld [vmem:[#allocation2 + $0x20c] sm:$0xf]
    %v322 = vld [vmem:[#allocation2 + $0x210] sm:$0xff]
    %v323 = vld [vmem:[#allocation2 + $0x218] sm:$0xf]
    %v324 = vld [vmem:[#allocation2 + $0x21c] sm:$0xff]
    %v325 = vld [vmem:[#allocation2 + $0x224] sm:$0xf]
    %v326 = vld [vmem:[#allocation2 + $0x228] sm:$0xff]
    %v327 = vld [vmem:[#allocation2 + $0x230] sm:$0xf]
    %v328 = vld [vmem:[#allocation2 + $0x234] sm:$0xff]
    %v329 = vld [vmem:[#allocation2 + $0x23c] sm:$0xf]
    %v330 = vld [vmem:[#allocation2 + $0x240] sm:$0xff]
    %v331 = vld [vmem:[#allocation2 + $0x248] sm:$0xf]
    %v332 = vld [vmem:[#allocation2 + $0x24c] sm:$0xff]
    %v333 = vld [vmem:[#allocation2 + $0x254] sm:$0xf]
    %v334 = vld [vmem:[%s4] sm:$0x7]
    %v336 = vlaneseq
    %v337 = vshrl.u32 %v336, 7
    %v338 = vsub.s32 0, %v337
    %v339 = vrot.slane %v334, %v338
    %v340 = vlaneseq
    %v341 = vshrl.u32 %v340, 7
    %v342 = vsub.s32 1, %v341
    %v343 = vrot.slane %v334, %v342
    %v344 = vlaneseq
    %v345 = vshrl.u32 %v344, 7
    %v346 = vsub.s32 2, %v345
    %v347 = vrot.slane %v334, %v346
    %v451 = vunpack.c.l.b16 %v234
    %v452 = vunpack.c.h.b16 %v234
    %v453 = vunpack.c.l.b16 %v235
    %v454 = vunpack.c.l.b16 %v236
    %v455 = vunpack.c.h.b16 %v236
    %v456 = vunpack.c.l.b16 %v237
    %v457 = vunpack.c.l.b16 %v238
    %v458 = vunpack.c.h.b16 %v238
    %v459 = vunpack.c.l.b16 %v239
    %v460 = vunpack.c.l.b16 %v240
    %v461 = vunpack.c.h.b16 %v240
    %v462 = vunpack.c.l.b16 %v241
    %v463 = vunpack.c.l.b16 %v242
    %v464 = vunpack.c.h.b16 %v242
    %v465 = vunpack.c.l.b16 %v243
    %v466 = vunpack.c.l.b16 %v244
    %v467 = vunpack.c.h.b16 %v244
    %v468 = vunpack.c.l.b16 %v245
    %v469 = vunpack.c.l.b16 %v246
    %v470 = vunpack.c.h.b16 %v246
    %v471 = vunpack.c.l.b16 %v247
    %v472 = vunpack.c.l.b16 %v248
    %v473 = vunpack.c.h.b16 %v248
    %v474 = vunpack.c.l.b16 %v249
    %v475 = vunpack.c.l.b16 %v250
    %v476 = vunpack.c.h.b16 %v250
    %v477 = vunpack.c.l.b16 %v251
    %v478 = vunpack.c.l.b16 %v252
    %v479 = vunpack.c.h.b16 %v252
    %v480 = vunpack.c.l.b16 %v253
    %v481 = vunpack.c.l.b16 %v254
    %v482 = vunpack.c.h.b16 %v254
    %v483 = vunpack.c.l.b16 %v255
    %v484 = vunpack.c.l.b16 %v256
    %v485 = vunpack.c.h.b16 %v256
    %v486 = vunpack.c.l.b16 %v257
    %v487 = vunpack.c.l.b16 %v258
    %v488 = vunpack.c.h.b16 %v258
    %v489 = vunpack.c.l.b16 %v259
    %v490 = vunpack.c.l.b16 %v260
    %v491 = vunpack.c.h.b16 %v260
    %v492 = vunpack.c.l.b16 %v261
    %v493 = vunpack.c.l.b16 %v262
    %v494 = vunpack.c.h.b16 %v262
    %v495 = vunpack.c.l.b16 %v263
    %v496 = vunpack.c.l.b16 %v264
    %v497 = vunpack.c.h.b16 %v264
    %v498 = vunpack.c.l.b16 %v265
    %v499 = vunpack.c.l.b16 %v266
    %v500 = vunpack.c.h.b16 %v266
    %v501 = vunpack.c.l.b16 %v267
    %v502 = vunpack.c.l.b16 %v268
    %v503 = vunpack.c.h.b16 %v268
    %v504 = vunpack.c.l.b16 %v269
    %v505 = vunpack.c.l.b16 %v270
    %v506 = vunpack.c.h.b16 %v270
    %v507 = vunpack.c.l.b16 %v271
    %v508 = vunpack.c.l.b16 %v272
    %v509 = vunpack.c.h.b16 %v272
    %v510 = vunpack.c.l.b16 %v273
    %v511 = vunpack.c.l.b16 %v274
    %v512 = vunpack.c.h.b16 %v274
    %v513 = vunpack.c.l.b16 %v275
    %v514 = vunpack.c.l.b16 %v276
    %v515 = vunpack.c.h.b16 %v276
    %v516 = vunpack.c.l.b16 %v277
    %v517 = vunpack.c.l.b16 %v278
    %v518 = vunpack.c.h.b16 %v278
    %v519 = vunpack.c.l.b16 %v279
    %v520 = vunpack.c.l.b16 %v280
    %v521 = vunpack.c.h.b16 %v280
    %v522 = vunpack.c.l.b16 %v281
    %v523 = vunpack.c.l.b16 %v282
    %v524 = vunpack.c.h.b16 %v282
    %v525 = vunpack.c.l.b16 %v283
    %v526 = vunpack.c.l.b16 %v284
    %v527 = vunpack.c.h.b16 %v284
    %v528 = vunpack.c.l.b16 %v285
    %v529 = vunpack.c.l.b16 %v286
    %v530 = vunpack.c.h.b16 %v286
    %v531 = vunpack.c.l.b16 %v287
    %v532 = vunpack.c.l.b16 %v288
    %v533 = vunpack.c.h.b16 %v288
    %v534 = vunpack.c.l.b16 %v289
    %v535 = vunpack.c.l.b16 %v290
    %v536 = vunpack.c.h.b16 %v290
    %v537 = vunpack.c.l.b16 %v291
    %v538 = vunpack.c.l.b16 %v292
    %v539 = vunpack.c.h.b16 %v292
    %v540 = vunpack.c.l.b16 %v293
    %v541 = vunpack.c.l.b16 %v294
    %v542 = vunpack.c.h.b16 %v294
    %v543 = vunpack.c.l.b16 %v295
    %v544 = vunpack.c.l.b16 %v296
    %v545 = vunpack.c.h.b16 %v296
    %v546 = vunpack.c.l.b16 %v297
    %v547 = vunpack.c.l.b16 %v298
    %v548 = vunpack.c.h.b16 %v298
    %v549 = vunpack.c.l.b16 %v299
    %v550 = vunpack.c.l.b16 %v300
    %v551 = vunpack.c.h.b16 %v300
    %v552 = vunpack.c.l.b16 %v301
    %v553 = vunpack.c.l.b16 %v302
    %v554 = vunpack.c.h.b16 %v302
    %v555 = vunpack.c.l.b16 %v303
    %v556 = vunpack.c.l.b16 %v304
    %v557 = vunpack.c.h.b16 %v304
    %v558 = vunpack.c.l.b16 %v305
    %v559 = vunpack.c.l.b16 %v306
    %v560 = vunpack.c.h.b16 %v306
    %v561 = vunpack.c.l.b16 %v307
    %v562 = vunpack.c.l.b16 %v308
    %v563 = vunpack.c.h.b16 %v308
    %v564 = vunpack.c.l.b16 %v309
    %v565 = vunpack.c.l.b16 %v310
    %v566 = vunpack.c.h.b16 %v310
    %v567 = vunpack.c.l.b16 %v311
    %v568 = vunpack.c.l.b16 %v312
    %v569 = vunpack.c.h.b16 %v312
    %v570 = vunpack.c.l.b16 %v313
    %v571 = vunpack.c.l.b16 %v314
    %v572 = vunpack.c.h.b16 %v314
    %v573 = vunpack.c.l.b16 %v315
    %v574 = vunpack.c.l.b16 %v316
    %v575 = vunpack.c.h.b16 %v316
    %v576 = vunpack.c.l.b16 %v317
    %v577 = vunpack.c.l.b16 %v318
    %v578 = vunpack.c.h.b16 %v318
    %v579 = vunpack.c.l.b16 %v319
    %v580 = vunpack.c.l.b16 %v320
    %v581 = vunpack.c.h.b16 %v320
    %v582 = vunpack.c.l.b16 %v321
    %v583 = vunpack.c.l.b16 %v322
    %v584 = vunpack.c.h.b16 %v322
    %v585 = vunpack.c.l.b16 %v323
    %v586 = vunpack.c.l.b16 %v324
    %v587 = vunpack.c.h.b16 %v324
    %v588 = vunpack.c.l.b16 %v325
    %v589 = vunpack.c.l.b16 %v326
    %v590 = vunpack.c.h.b16 %v326
    %v591 = vunpack.c.l.b16 %v327
    %v592 = vunpack.c.l.b16 %v328
    %v593 = vunpack.c.h.b16 %v328
    %v594 = vunpack.c.l.b16 %v329
    %v595 = vunpack.c.l.b16 %v330
    %v596 = vunpack.c.h.b16 %v330
    %v597 = vunpack.c.l.b16 %v331
    %v598 = vunpack.c.l.b16 %v332
    %v599 = vunpack.c.h.b16 %v332
    %v600 = vunpack.c.l.b16 %v333
    %v601 = vpack.c.b16 %v454, %v451
    %v602 = vpack.c.b16 %v455, %v452
    %v603 = vpack.c.b16 %v456, %v453
    %v604 = vpack.c.b16 %v460, %v457
    %v605 = vpack.c.b16 %v461, %v458
    %v606 = vpack.c.b16 %v462, %v459
    %v607 = vpack.c.b16 %v466, %v463
    %v608 = vpack.c.b16 %v467, %v464
    %v609 = vpack.c.b16 %v468, %v465
    %v610 = vpack.c.b16 %v472, %v469
    %v611 = vpack.c.b16 %v473, %v470
    %v612 = vpack.c.b16 %v474, %v471
    %v613 = vpack.c.b16 %v478, %v475
    %v614 = vpack.c.b16 %v479, %v476
    %v615 = vpack.c.b16 %v480, %v477
    %v616 = vpack.c.b16 %v484, %v481
    %v617 = vpack.c.b16 %v485, %v482
    %v618 = vpack.c.b16 %v486, %v483
    %v619 = vpack.c.b16 %v490, %v487
    %v620 = vpack.c.b16 %v491, %v488
    %v621 = vpack.c.b16 %v492, %v489
    %v622 = vpack.c.b16 %v496, %v493
    %v623 = vpack.c.b16 %v497, %v494
    %v624 = vpack.c.b16 %v498, %v495
    %v625 = vpack.c.b16 %v502, %v499
    %v626 = vpack.c.b16 %v503, %v500
    %v627 = vpack.c.b16 %v504, %v501
    %v628 = vpack.c.b16 %v508, %v505
    %v629 = vpack.c.b16 %v509, %v506
    %v630 = vpack.c.b16 %v510, %v507
    %v631 = vpack.c.b16 %v514, %v511
    %v632 = vpack.c.b16 %v515, %v512
    %v633 = vpack.c.b16 %v516, %v513
    %v634 = vpack.c.b16 %v520, %v517
    %v635 = vpack.c.b16 %v521, %v518
    %v636 = vpack.c.b16 %v522, %v519
    %v637 = vpack.c.b16 %v526, %v523
    %v638 = vpack.c.b16 %v527, %v524
    %v639 = vpack.c.b16 %v528, %v525
    %v640 = vpack.c.b16 %v532, %v529
    %v641 = vpack.c.b16 %v533, %v530
    %v642 = vpack.c.b16 %v534, %v531
    %v643 = vpack.c.b16 %v538, %v535
    %v644 = vpack.c.b16 %v539, %v536
    %v645 = vpack.c.b16 %v540, %v537
    %v646 = vpack.c.b16 %v544, %v541
    %v647 = vpack.c.b16 %v545, %v542
    %v648 = vpack.c.b16 %v546, %v543
    %v649 = vpack.c.b16 %v550, %v547
    %v650 = vpack.c.b16 %v551, %v548
    %v651 = vpack.c.b16 %v552, %v549
    %v652 = vpack.c.b16 %v556, %v553
    %v653 = vpack.c.b16 %v557, %v554
    %v654 = vpack.c.b16 %v558, %v555
    %v655 = vpack.c.b16 %v562, %v559
    %v656 = vpack.c.b16 %v563, %v560
    %v657 = vpack.c.b16 %v564, %v561
    %v658 = vpack.c.b16 %v568, %v565
    %v659 = vpack.c.b16 %v569, %v566
    %v660 = vpack.c.b16 %v570, %v567
    %v661 = vpack.c.b16 %v574, %v571
    %v662 = vpack.c.b16 %v575, %v572
    %v663 = vpack.c.b16 %v576, %v573
    %v664 = vpack.c.b16 %v580, %v577
    %v665 = vpack.c.b16 %v581, %v578
    %v666 = vpack.c.b16 %v582, %v579
    %v667 = vpack.c.b16 %v586, %v583
    %v668 = vpack.c.b16 %v587, %v584
    %v669 = vpack.c.b16 %v588, %v585
    %v670 = vpack.c.b16 %v592, %v589
    %v671 = vpack.c.b16 %v593, %v590
    %v672 = vpack.c.b16 %v594, %v591
    %v673 = vpack.c.b16 %v598, %v595
    %v674 = vpack.c.b16 %v599, %v596
    %v675 = vpack.c.b16 %v600, %v597
    %vm751 = vcmask 130048
    %v753 = vsel %vm751, %v233, 0
    %755 = vmatprep.subr.bf16.mxu0 %v602
    %756 = vmatpush1.bf16.msra.mxu0 %v601
    %757 = vmatprep.subr.bf16.mxu0 %v605
    %758 = vmatpush1.bf16.msra.mxu0 %v604
    %759 = vmatprep.subr.bf16.mxu0 %v608
    %760 = vmatpush1.bf16.msra.mxu0 %v607
    %761 = vmatprep.subr.bf16.mxu0 %v611
    %762 = vmatpush1.bf16.msra.mxu0 %v610
    %763 = vmatprep.subr.bf16.mxu0 %v614
    %764 = vmatpush1.bf16.msra.mxu0 %v613
    %765 = vmatprep.subr.bf16.mxu0 %v617
    %766 = vmatpush1.bf16.msra.mxu0 %v616
    %767 = vmatprep.subr.bf16.mxu0 %v620
    %768 = vmatpush1.bf16.msra.mxu0 %v619
    %769 = vmatprep.subr.bf16.mxu0 %v623
    %770 = vmatpush1.bf16.msra.mxu0 %v622
    %771 = vmatprep.subr.bf16.mxu0 %v626
    %772 = vmatpush1.bf16.msra.mxu0 %v625
    %773 = vmatprep.subr.bf16.mxu0 %v629
    %774 = vmatpush1.bf16.msra.mxu0 %v628
    %775 = vmatprep.subr.bf16.mxu0 %v632
    %776 = vmatpush1.bf16.msra.mxu0 %v631
    %777 = vmatprep.subr.bf16.mxu0 %v635
    %778 = vmatpush1.bf16.msra.mxu0 %v634
    %779 = vmatprep.subr.bf16.mxu0 %v638
    %780 = vmatpush1.bf16.msra.mxu0 %v637
    %781 = vmatprep.subr.bf16.mxu0 %v641
    %782 = vmatpush1.bf16.msra.mxu0 %v640
    %783 = vmatprep.subr.bf16.mxu0 %v644
    %784 = vmatpush1.bf16.msra.mxu0 %v643
    %785 = vmatprep.subr.bf16.mxu0 %v647
    %786 = vmatpush1.bf16.msra.mxu0 %v646
    %787 = vmatprep.mubr.bf16.mxu0 %v231
    %788 = vmatmul.mubr.bf16.gmra.mrb[0].mxu0 %v230
    %v789 = vpop.f32.mrb[0].mxu0
    %v790 = vadd.f32 %v339, %v789
    %v791 = vpop.f32.mrb[0].mxu0
    %v792 = vadd.f32 %v343, %v791
    %v793 = vpop.f32.mrb[0].mxu0
    %v794 = vpop.f32.mrb[0].mxu0
    %795 = vdwg.mxu0
    %796 = vmatprep.subr.bf16.mxu0 %v650
    %797 = vmatpush1.bf16.msra.mxu0 %v649
    %798 = vmatprep.subr.bf16.mxu0 %v653
    %799 = vmatpush1.bf16.msra.mxu0 %v652
    %800 = vmatprep.subr.bf16.mxu0 %v656
    %801 = vmatpush1.bf16.msra.mxu0 %v655
    %802 = vmatprep.subr.bf16.mxu0 %v659
    %803 = vmatpush1.bf16.msra.mxu0 %v658
    %804 = vmatprep.subr.bf16.mxu0 %v662
    %805 = vmatpush1.bf16.msra.mxu0 %v661
    %806 = vmatprep.subr.bf16.mxu0 %v665
    %807 = vmatpush1.bf16.msra.mxu0 %v664
    %808 = vmatprep.subr.bf16.mxu0 %v668
    %809 = vmatpush1.bf16.msra.mxu0 %v667
    %810 = vmatprep.subr.bf16.mxu0 %v671
    %811 = vmatpush1.bf16.msra.mxu0 %v670
    %812 = vmatprep.subr.bf16.mxu0 %v674
    %813 = vmatpush1.bf16.msra.mxu0 %v673
    %814 = vmatprep.subr.bf16.mxu0 0
    %815 = vmatpush1.bf16.msra.mxu0 0
    %816 = vmatprep.subr.bf16.mxu0 0
    %817 = vmatpush1.bf16.msra.mxu0 0
    %818 = vmatprep.subr.bf16.mxu0 0
    %819 = vmatpush1.bf16.msra.mxu0 0
    %820 = vmatprep.subr.bf16.mxu0 0
    %821 = vmatpush1.bf16.msra.mxu0 0
    %822 = vmatprep.subr.bf16.mxu0 0
    %823 = vmatpush1.bf16.msra.mxu0 0
    %824 = vmatprep.subr.bf16.mxu0 0
    %825 = vmatpush1.bf16.msra.mxu0 0
    %826 = vmatprep.subr.bf16.mxu0 0
    %827 = vmatpush1.bf16.msra.mxu0 0
    %828 = vmatprep.mubr.bf16.mxu0 %v753
    %829 = vmatmul.mubr.bf16.gmra.mrb[0].mxu0 %v232
    %v830 = vpop.f32.mrb[0].mxu0
    %v831 = vadd.f32 %v790, %v830
    %v832 = vpop.f32.mrb[0].mxu0
    %v833 = vadd.f32 %v792, %v832
    %v834 = vpop.f32.mrb[0].mxu0
    %v835 = vpop.f32.mrb[0].mxu0
    %836 = vdwg.mxu0
    %837 = vmatprep.subr.bf16.mxu0 0
    %838 = vmatpush1.bf16.msra.mxu0 %v603
    %839 = vmatprep.subr.bf16.mxu0 0
    %840 = vmatpush1.bf16.msra.mxu0 %v606
    %841 = vmatprep.subr.bf16.mxu0 0
    %842 = vmatpush1.bf16.msra.mxu0 %v609
    %843 = vmatprep.subr.bf16.mxu0 0
    %844 = vmatpush1.bf16.msra.mxu0 %v612
    %845 = vmatprep.subr.bf16.mxu0 0
    %846 = vmatpush1.bf16.msra.mxu0 %v615
    %847 = vmatprep.subr.bf16.mxu0 0
    %848 = vmatpush1.bf16.msra.mxu0 %v618
    %849 = vmatprep.subr.bf16.mxu0 0
    %850 = vmatpush1.bf16.msra.mxu0 %v621
    %851 = vmatprep.subr.bf16.mxu0 0
    %852 = vmatpush1.bf16.msra.mxu0 %v624
    %853 = vmatprep.subr.bf16.mxu0 0
    %854 = vmatpush1.bf16.msra.mxu0 %v627
    %855 = vmatprep.subr.bf16.mxu0 0
    %856 = vmatpush1.bf16.msra.mxu0 %v630
    %857 = vmatprep.subr.bf16.mxu0 0
    %858 = vmatpush1.bf16.msra.mxu0 %v633
    %859 = vmatprep.subr.bf16.mxu0 0
    %860 = vmatpush1.bf16.msra.mxu0 %v636
    %861 = vmatprep.subr.bf16.mxu0 0
    %862 = vmatpush1.bf16.msra.mxu0 %v639
    %863 = vmatprep.subr.bf16.mxu0 0
    %864 = vmatpush1.bf16.msra.mxu0 %v642
    %865 = vmatprep.subr.bf16.mxu0 0
    %866 = vmatpush1.bf16.msra.mxu0 %v645
    %867 = vmatprep.subr.bf16.mxu0 0
    %868 = vmatpush1.bf16.msra.mxu0 %v648
    %869 = vmatprep.mubr.bf16.mxu0 %v231
    %870 = vmatmul.mubr.bf16.gmra.mrb[0].mxu0 %v230
    %v871 = vpop.f32.mrb[0].mxu0
    %v872 = vadd.f32 %v347, %v871
    %v873 = vpop.f32.mrb[0].mxu0
    %v874 = vpop.f32.mrb[0].mxu0
    %v875 = vpop.f32.mrb[0].mxu0
    %876 = vdwg.mxu0
    %877 = vmatprep.subr.bf16.mxu0 0
    %878 = vmatpush1.bf16.msra.mxu0 %v651
    %879 = vmatprep.subr.bf16.mxu0 0
    %880 = vmatpush1.bf16.msra.mxu0 %v654
    %881 = vmatprep.subr.bf16.mxu0 0
    %882 = vmatpush1.bf16.msra.mxu0 %v657
    %883 = vmatprep.subr.bf16.mxu0 0
    %884 = vmatpush1.bf16.msra.mxu0 %v660
    %885 = vmatprep.subr.bf16.mxu0 0
    %886 = vmatpush1.bf16.msra.mxu0 %v663
    %887 = vmatprep.subr.bf16.mxu0 0
    %888 = vmatpush1.bf16.msra.mxu0 %v666
    %889 = vmatprep.subr.bf16.mxu0 0
    %890 = vmatpush1.bf16.msra.mxu0 %v669
    %891 = vmatprep.subr.bf16.mxu0 0
    %892 = vmatpush1.bf16.msra.mxu0 %v672
    %893 = vmatprep.subr.bf16.mxu0 0
    %894 = vmatpush1.bf16.msra.mxu0 %v675
    %895 = vmatprep.subr.bf16.mxu0 0
    %896 = vmatpush1.bf16.msra.mxu0 0
    %897 = vmatprep.subr.bf16.mxu0 0
    %898 = vmatpush1.bf16.msra.mxu0 0
    %899 = vmatprep.subr.bf16.mxu0 0
    %900 = vmatpush1.bf16.msra.mxu0 0
    %901 = vmatprep.subr.bf16.mxu0 0
    %902 = vmatpush1.bf16.msra.mxu0 0
    %903 = vmatprep.subr.bf16.mxu0 0
    %904 = vmatpush1.bf16.msra.mxu0 0
    %905 = vmatprep.subr.bf16.mxu0 0
    %906 = vmatpush1.bf16.msra.mxu0 0
    %907 = vmatprep.subr.bf16.mxu0 0
    %908 = vmatpush1.bf16.msra.mxu0 0
    %909 = vmatprep.mubr.bf16.mxu0 %v753
    %910 = vmatmul.mubr.bf16.gmra.mrb[0].mxu0 %v232
    %v911 = vpop.f32.mrb[0].mxu0
    %v912 = vadd.f32 %v872, %v911
    %v913 = vpop.f32.mrb[0].mxu0
    %v914 = vpop.f32.mrb[0].mxu0
    %v915 = vpop.f32.mrb[0].mxu0
    %916 = vdwg.mxu0
    %v917 = vmax.f32 %v831, 0.0
    %v918 = vmax.f32 %v833, 0.0
    %v919 = vmax.f32 %v912, 0.0
    %v920 = vpack.c.bf16 %v917, %v917
    %v921 = vpack.c.bf16 %v918, %v918
    %v922 = vpack.c.bf16 %v919, %v919
    %v923 = vld [vmem:[%s5] sm:$0xf]
    %v924 = vld [vmem:[%s5 + $0x4] sm:$0xf]
    %v925 = vld [vmem:[%s5 + $0x8] sm:$0xf]
    %v926 = vld [vmem:[%s5 + $0xc] sm:$0xf]
    %v927 = vld [vmem:[%s5 + $0x10] sm:$0xf]
    %v928 = vld [vmem:[%s5 + $0x14] sm:$0xf]
    %v929 = vld [vmem:[%s5 + $0x18] sm:$0xf]
    %v930 = vld [vmem:[%s5 + $0x1c] sm:$0xf]
    %v931 = vld [vmem:[%s5 + $0x20] sm:$0xf]
    %v932 = vld [vmem:[%s5 + $0x24] sm:$0xf]
    %v933 = vld [vmem:[%s5 + $0x28] sm:$0xf]
    %v934 = vld [vmem:[%s5 + $0x2c] sm:$0xf]
    %v935 = vld [vmem:[%s5 + $0x30] sm:$0xf]
    %v936 = vld [vmem:[%s5 + $0x34] sm:$0xf]
    %v937 = vld [vmem:[%s5 + $0x38] sm:$0xf]
    %v938 = vld [vmem:[%s5 + $0x3c] sm:$0xf]
    %v939 = vld [vmem:[%s5 + $0x40] sm:$0xf]
    %v940 = vld [vmem:[%s5 + $0x44] sm:$0xf]
    %v941 = vld [vmem:[%s5 + $0x48] sm:$0xf]
    %v942 = vld [vmem:[%s5 + $0x4c] sm:$0xf]
    %v943 = vld [vmem:[%s5 + $0x50] sm:$0xf]
    %v944 = vld [vmem:[%s5 + $0x54] sm:$0xf]
    %v945 = vld [vmem:[%s5 + $0x58] sm:$0xf]
    %v946 = vld [vmem:[%s5 + $0x5c] sm:$0xf]
    %v947 = vld [vmem:[%s5 + $0x60] sm:$0xf]
    %v948 = vld [vmem:[%s5 + $0x64] sm:$0xf]
    %v949 = vld [vmem:[%s5 + $0x68] sm:$0xf]
    %v950 = vld [vmem:[%s5 + $0x6c] sm:$0xf]
    %v951 = vld [vmem:[%s5 + $0x70] sm:$0xf]
    %v952 = vld [vmem:[%s5 + $0x74] sm:$0xf]
    %v953 = vld [vmem:[%s5 + $0x78] sm:$0xf]
    %v954 = vld [vmem:[%s5 + $0x7c] sm:$0xf]
    %v955 = vld [vmem:[%s5 + $0x80] sm:$0xf]
    %v956 = vld [vmem:[%s5 + $0x84] sm:$0xf]
    %v957 = vld [vmem:[%s5 + $0x88] sm:$0xf]
    %v958 = vld [vmem:[%s5 + $0x8c] sm:$0xf]
    %v959 = vld [vmem:[%s5 + $0x90] sm:$0xf]
    %v960 = vld [vmem:[%s5 + $0x94] sm:$0x3]
    %v961 = vld [vmem:[%s6] sm:$0x1]
    %v963 = vlaneseq
    %v964 = vshrl.u32 %v963, 7
    %v965 = vsub.s32 0, %v964
    %v966 = vrot.slane %v961, %v965
    %v1006 = vunpack.c.l.b16 %v923
    %v1007 = vunpack.c.l.b16 %v924
    %v1008 = vunpack.c.l.b16 %v925
    %v1009 = vunpack.c.l.b16 %v926
    %v1010 = vunpack.c.l.b16 %v927
    %v1011 = vunpack.c.l.b16 %v928
    %v1012 = vunpack.c.l.b16 %v929
    %v1013 = vunpack.c.l.b16 %v930
    %v1014 = vunpack.c.l.b16 %v931
    %v1015 = vunpack.c.l.b16 %v932
    %v1016 = vunpack.c.l.b16 %v933
    %v1017 = vunpack.c.l.b16 %v934
    %v1018 = vunpack.c.l.b16 %v935
    %v1019 = vunpack.c.l.b16 %v936
    %v1020 = vunpack.c.l.b16 %v937
    %v1021 = vunpack.c.l.b16 %v938
    %v1022 = vunpack.c.l.b16 %v939
    %v1023 = vunpack.c.l.b16 %v940
    %v1024 = vunpack.c.l.b16 %v941
    %v1025 = vunpack.c.l.b16 %v942
    %v1026 = vunpack.c.l.b16 %v943
    %v1027 = vunpack.c.l.b16 %v944
    %v1028 = vunpack.c.l.b16 %v945
    %v1029 = vunpack.c.l.b16 %v946
    %v1030 = vunpack.c.l.b16 %v947
    %v1031 = vunpack.c.l.b16 %v948
    %v1032 = vunpack.c.l.b16 %v949
    %v1033 = vunpack.c.l.b16 %v950
    %v1034 = vunpack.c.l.b16 %v951
    %v1035 = vunpack.c.l.b16 %v952
    %v1036 = vunpack.c.l.b16 %v953
    %v1037 = vunpack.c.l.b16 %v954
    %v1038 = vunpack.c.l.b16 %v955
    %v1039 = vunpack.c.l.b16 %v956
    %v1040 = vunpack.c.l.b16 %v957
    %v1041 = vunpack.c.l.b16 %v958
    %v1042 = vunpack.c.l.b16 %v959
    %v1043 = vunpack.c.l.b16 %v960
    %v1044 = vpack.c.b16 %v1007, %v1006
    %v1045 = vpack.c.b16 %v1009, %v1008
    %v1046 = vpack.c.b16 %v1011, %v1010
    %v1047 = vpack.c.b16 %v1013, %v1012
    %v1048 = vpack.c.b16 %v1015, %v1014
    %v1049 = vpack.c.b16 %v1017, %v1016
    %v1050 = vpack.c.b16 %v1019, %v1018
    %v1051 = vpack.c.b16 %v1021, %v1020
    %v1052 = vpack.c.b16 %v1023, %v1022
    %v1053 = vpack.c.b16 %v1025, %v1024
    %v1054 = vpack.c.b16 %v1027, %v1026
    %v1055 = vpack.c.b16 %v1029, %v1028
    %v1056 = vpack.c.b16 %v1031, %v1030
    %v1057 = vpack.c.b16 %v1033, %v1032
    %v1058 = vpack.c.b16 %v1035, %v1034
    %v1059 = vpack.c.b16 %v1037, %v1036
    %v1060 = vpack.c.b16 %v1039, %v1038
    %v1061 = vpack.c.b16 %v1041, %v1040
    %v1062 = vpack.c.b16 %v1043, %v1042
    %vm1081 = vcmask 359424
    %v1083 = vsel %vm1081, %v922, 0
    %vm1085 = vcmask 1045504
    %v1087 = vsel %vm1085, %v1062, 0
    %1089 = vmatprep.subr.bf16.mxu0 0
    %1090 = vmatpush1.bf16.msra.mxu0 %v1044
    %1091 = vmatprep.subr.bf16.mxu0 0
    %1092 = vmatpush1.bf16.msra.mxu0 %v1045
    %1093 = vmatprep.subr.bf16.mxu0 0
    %1094 = vmatpush1.bf16.msra.mxu0 %v1046
    %1095 = vmatprep.subr.bf16.mxu0 0
    %1096 = vmatpush1.bf16.msra.mxu0 %v1047
    %1097 = vmatprep.subr.bf16.mxu0 0
    %1098 = vmatpush1.bf16.msra.mxu0 %v1048
    %1099 = vmatprep.subr.bf16.mxu0 0
    %1100 = vmatpush1.bf16.msra.mxu0 %v1049
    %1101 = vmatprep.subr.bf16.mxu0 0
    %1102 = vmatpush1.bf16.msra.mxu0 %v1050
    %1103 = vmatprep.subr.bf16.mxu0 0
    %1104 = vmatpush1.bf16.msra.mxu0 %v1051
    %1105 = vmatprep.subr.bf16.mxu0 0
    %1106 = vmatpush1.bf16.msra.mxu0 %v1052
    %1107 = vmatprep.subr.bf16.mxu0 0
    %1108 = vmatpush1.bf16.msra.mxu0 %v1053
    %1109 = vmatprep.subr.bf16.mxu0 0
    %1110 = vmatpush1.bf16.msra.mxu0 %v1054
    %1111 = vmatprep.subr.bf16.mxu0 0
    %1112 = vmatpush1.bf16.msra.mxu0 %v1055
    %1113 = vmatprep.subr.bf16.mxu0 0
    %1114 = vmatpush1.bf16.msra.mxu0 %v1056
    %1115 = vmatprep.subr.bf16.mxu0 0
    %1116 = vmatpush1.bf16.msra.mxu0 %v1057
    %1117 = vmatprep.subr.bf16.mxu0 0
    %1118 = vmatpush1.bf16.msra.mxu0 %v1058
    %1119 = vmatprep.subr.bf16.mxu0 0
    %1120 = vmatpush1.bf16.msra.mxu0 %v1059
    %1121 = vmatprep.mubr.bf16.mxu0 %v921
    %1122 = vmatmul.mubr.bf16.gmra.mrb[0].mxu0 %v920
    %v1123 = vpop.f32.mrb[0].mxu0
    %v1124 = vadd.f32 %v966, %v1123
    %v1125 = vpop.f32.mrb[0].mxu0
    %v1126 = vpop.f32.mrb[0].mxu0
    %v1127 = vpop.f32.mrb[0].mxu0
    %1128 = vdwg.mxu0
    %1129 = vmatprep.subr.bf16.mxu0 0
    %1130 = vmatpush1.bf16.msra.mxu0 %v1060
    %1131 = vmatprep.subr.bf16.mxu0 0
    %1132 = vmatpush1.bf16.msra.mxu0 %v1061
    %1133 = vmatprep.subr.bf16.mxu0 0
    %1134 = vmatpush1.bf16.msra.mxu0 %v1087
    %1135 = vmatprep.subr.bf16.mxu0 0
    %1136 = vmatpush1.bf16.msra.mxu0 0
    %1137 = vmatprep.subr.bf16.mxu0 0
    %1138 = vmatpush1.bf16.msra.mxu0 0
    %1139 = vmatprep.subr.bf16.mxu0 0
    %1140 = vmatpush1.bf16.msra.mxu0 0
    %1141 = vmatprep.subr.bf16.mxu0 0
    %1142 = vmatpush1.bf16.msra.mxu0 0
    %1143 = vmatprep.subr.bf16.mxu0 0
    %1144 = vmatpush1.bf16.msra.mxu0 0
    %1145 = vmatprep.subr.bf16.mxu0 0
    %1146 = vmatpush1.bf16.msra.mxu0 0
    %1147 = vmatprep.subr.bf16.mxu0 0
    %1148 = vmatpush1.bf16.msra.mxu0 0
    %1149 = vmatprep.subr.bf16.mxu0 0
    %1150 = vmatpush1.bf16.msra.mxu0 0
    %1151 = vmatprep.subr.bf16.mxu0 0
    %1152 = vmatpush1.bf16.msra.mxu0 0
    %1153 = vmatprep.subr.bf16.mxu0 0
    %1154 = vmatpush1.bf16.msra.mxu0 0
    %1155 = vmatprep.subr.bf16.mxu0 0
    %1156 = vmatpush1.bf16.msra.mxu0 0
    %1157 = vmatprep.subr.bf16.mxu0 0
    %1158 = vmatpush1.bf16.msra.mxu0 0
    %1159 = vmatprep.subr.bf16.mxu0 0
    %1160 = vmatpush1.bf16.msra.mxu0 0
    %1161 = vmatprep.mubr.bf16.mxu0 0
    %1162 = vmatmul.mubr.bf16.gmra.mrb[0].mxu0 %v1083
    %v1163 = vpop.f32.mrb[0].mxu0
    %v1164 = vadd.f32 %v1124, %v1163
    %v1165 = vpop.f32.mrb[0].mxu0
    %v1166 = vpop.f32.mrb[0].mxu0
    %v1167 = vpop.f32.mrb[0].mxu0
    %1168 = vdwg.mxu0
    %v1169 = vtanh.pop %v1164
    %vm1170 = vcmask 31744
    %1171 = vst.msk [vmem:[%s7] sm:$0xff] %vm1170, %v1169
    // Predicated region
    $region34: #{tpu_custom_call.1} parent=1 // pred_check
      _
    $region35: #{tpu_custom_call.1} parent=1 // pred_check_branch
      %1173 = sbr.rel (0) target = $region37
    $region36: #{tpu_custom_call.1} parent=1 // pred_region
      _
    $region37: #{tpu_custom_call.1} parent=1 // pred_fallthru
      _
    // Predicated region
    $region38: #{tpu_custom_call.1} parent=1 // pred_check
      _
    $region39: #{tpu_custom_call.1} parent=1 // pred_check_branch
      %1175 = sbr.rel (0) target = $region41
    $region40: #{tpu_custom_call.1} parent=1 // pred_region
      _
    $region41: #{tpu_custom_call.1} parent=1 // pred_fallthru
      _
    %1176 = vsyncpa [#allocation3], 1

</llo_original>
